<compile_context>
chip_gen: v7x
topology: tpu7x:2x2x1
jax: 0.10.0
libtpu: 0.0.40
codegen_flags: <defaults>
</compile_context>

<pallas_src>
import functools

import jax
import jax.numpy as jnp
from jax.experimental import pallas as pl
from jax.experimental.pallas import tpu as pltpu


def actor_kernel(x_ref, w1_ref, w2_ref, w3_ref, b_ref, o_ref, *,
                 fc1_dims, fc2_dims, n_actions):
    # Biases arrive concatenated as a single f32 row: [b1 | b2 | b3].
    b_all = b_ref[...]
    b1 = b_all[:, :fc1_dims]
    b2 = b_all[:, fc1_dims:fc1_dims + fc2_dims]
    b3 = b_all[:, fc1_dims + fc2_dims:fc1_dims + fc2_dims + n_actions]

    # fc1 -> ReLU   (bf16 operands, f32 MXU accumulation, f32 epilogue)
    h1 = jnp.dot(x_ref[...], w1_ref[...], preferred_element_type=jnp.float32)
    h1 = jnp.maximum(h1 + b1, 0.0)

    # fc2 -> ReLU
    h2 = jnp.dot(h1.astype(w2_ref.dtype), w2_ref[...],
                 preferred_element_type=jnp.float32)
    h2 = jnp.maximum(h2 + b2, 0.0)

    # mu -> tanh
    mu = jnp.dot(h2.astype(w3_ref.dtype), w3_ref[...],
                 preferred_element_type=jnp.float32)
    o_ref[...] = jnp.tanh(mu + b3).astype(o_ref.dtype)


def prepare_params(params, compute_dtype=jnp.bfloat16):
    """One-time parameter prep (do this at init/checkpoint-load time, NOT per call):
    transpose PyTorch (out, in) weights to (in, out), cast to the compute dtype,
    and concatenate biases into a single f32 row."""
    w1 = params["fc1_w"].T.astype(compute_dtype)   # (in,  fc1)
    w2 = params["fc2_w"].T.astype(compute_dtype)   # (fc1, fc2)
    w3 = params["mu_w"].T.astype(compute_dtype)    # (fc2, n_actions)
    b_all = jnp.concatenate(
        [params["fc1_b"], params["fc2_b"], params["mu_b"]]
    )[None, :].astype(jnp.float32)                 # (1, fc1+fc2+n_actions)
    return dict(w1=w1, w2=w2, w3=w3, b=b_all)


def _round_up(x, m):
    return ((x + m - 1) // m) * m


def actor_forward(state, prep, *, block_b=128):
    """state: (B, input_dims) f32. prep: output of prepare_params()."""
    w1, w2, w3, b_all = prep["w1"], prep["w2"], prep["w3"], prep["b"]
    B, in_dims = state.shape
    fc1_dims = w1.shape[1]
    fc2_dims = w2.shape[1]
    n_actions = w3.shape[1]
    compute_dtype = w1.dtype

    # Batch tile: at least 8 (sublane alignment), at most block_b. Pad B up to a
    # multiple of TB so every grid step sees a full tile; padded rows are sliced
    # off after the call.
    TB = min(block_b, _round_up(B, 8))
    Bp = _round_up(B, TB)

    x = state.astype(compute_dtype)
    if Bp != B:
        x = jnp.pad(x, ((0, Bp - B), (0, 0)))

    # Weights/biases: full-array blocks with a constant index_map -> fetched once,
    # VMEM-resident across all batch tiles. State/output: tiled along batch and
    # double-buffered by the BlockSpec pipeline.
    const2d = lambda a: pl.BlockSpec(a.shape, lambda i: (0, 0))

    kernel = functools.partial(actor_kernel, fc1_dims=fc1_dims,
                               fc2_dims=fc2_dims, n_actions=n_actions)

    out = pl.pallas_call(
        kernel,
        out_shape=jax.ShapeDtypeStruct((Bp, n_actions), jnp.float32),
        grid=(Bp // TB,),
        in_specs=[
            pl.BlockSpec((TB, in_dims), lambda i: (i, 0)),   # state: batch-tiled
            const2d(w1),
            const2d(w2),
            const2d(w3),
            const2d(b_all),
        ],
        out_specs=pl.BlockSpec((TB, n_actions), lambda i: (i, 0)),
        compiler_params=pltpu.CompilerParams(
            dimension_semantics=("parallel",)),
    )(x, w1, w2, w3, b_all)

    return out[:B] if Bp != B else out


def init_params(key, input_dims, fc1_dims, fc2_dims, n_actions):
    """Deterministic synthetic init matching nn.Linear shapes: W (out, in), b (out,)."""
    ks = jax.random.split(key, 6)

    def lin(kw, kb, fan_in, fan_out):
        bound = 1.0 / jnp.sqrt(fan_in)
        w = jax.random.uniform(kw, (fan_out, fan_in), jnp.float32, -bound, bound)
        b = jax.random.uniform(kb, (fan_out,), jnp.float32, -bound, bound)
        return w, b

    fc1_w, fc1_b = lin(ks[0], ks[1], input_dims, fc1_dims)
    fc2_w, fc2_b = lin(ks[2], ks[3], fc1_dims, fc2_dims)
    mu_w, mu_b = lin(ks[4], ks[5], fc2_dims, n_actions)
    return dict(fc1_w=fc1_w, fc1_b=fc1_b, fc2_w=fc2_w, fc2_b=fc2_b,
                mu_w=mu_w, mu_b=mu_b)


def ref_forward_f32(x, p):
    """Pure-JAX f32 reference with the same semantics as the PyTorch forward."""
    h = jnp.maximum(x @ p["fc1_w"].T + p["fc1_b"], 0.0)
    h = jnp.maximum(h @ p["fc2_w"].T + p["fc2_b"], 0.0)
    return jnp.tanh(h @ p["mu_w"].T + p["mu_b"])


if __name__ == "__main__":
    # Shapes consistent with ActorNetwork(alfa, input_dims=(8,), fc1_dims=32,
    # fc2_dims=32, n_actions=4, ...).
    input_dims, fc1_dims, fc2_dims, n_actions = 8, 32, 32, 4

    key = jax.random.PRNGKey(0)
    k_state, k_state_big, k_params = jax.random.split(key, 3)
    params = init_params(k_params, input_dims, fc1_dims, fc2_dims, n_actions)
    prep = prepare_params(params)  # one-time: transpose + bf16 cast + bias pack

    # Case 1: tiny batch (exercises the tail-padding path: B=2 -> TB=8, grid=(1,)).
    state_small = jax.random.normal(k_state, (2, input_dims), jnp.float32)
    out_small = actor_forward(state_small, prep)
    jax.block_until_ready(out_small)
    assert out_small.shape == (2, n_actions)
    assert jnp.allclose(out_small, ref_forward_f32(state_small, params), atol=2e-2), \
        "small-batch mismatch vs f32 reference"

    # Case 2: multi-tile batch (exercises the batch grid: B=256 -> TB=128, grid=(2,)).
    state_big = jax.random.normal(k_state_big, (256, input_dims), jnp.float32)
    out_big = actor_forward(state_big, prep)
    jax.block_until_ready(out_big)
    assert out_big.shape == (256, n_actions)
    assert jnp.allclose(out_big, ref_forward_f32(state_big, params), atol=2e-2), \
        "big-batch mismatch vs f32 reference"

    # TODO(synk): optimizer (Adam) and checkpoint save/load from the PyTorch class
    # are host-side training/IO utilities with no kernel equivalent; only forward()
    # is implemented here.
    print("KERNEL_OK")
</pallas_src>

<mosaic_0001>
module attributes {stable_mosaic.version = 11 : i64} {
  func.func @actor_kernel(%arg0: i32, %arg1: memref<8x8xbf16, #tpu.memory_space<vmem>>, %arg2: memref<8x32xbf16, #tpu.memory_space<vmem>>, %arg3: memref<32x32xbf16, #tpu.memory_space<vmem>>, %arg4: memref<32x4xbf16, #tpu.memory_space<vmem>>, %arg5: memref<1x68xf32, #tpu.memory_space<vmem>>, %arg6: memref<8x4xf32, #tpu.memory_space<vmem>>) attributes {dimension_semantics = [#tpu.dimension_semantics<parallel>], iteration_bounds = array<i64: 1>, scalar_prefetch = 0 : i64, scratch_operands = 0 : i64, tpu.core_type = #tpu.core_type<tc>, window_params = [{transform_indices = @transform_0, window_bounds = array<i64: 8, 8>}, {pipeline_mode = #tpu.pipeline_mode<synchronous>, transform_indices = @transform_1, window_bounds = array<i64: 8, 32>}, {pipeline_mode = #tpu.pipeline_mode<synchronous>, transform_indices = @transform_2, window_bounds = array<i64: 32, 32>}, {pipeline_mode = #tpu.pipeline_mode<synchronous>, transform_indices = @transform_3, window_bounds = array<i64: 32, 4>}, {pipeline_mode = #tpu.pipeline_mode<synchronous>, transform_indices = @transform_4, window_bounds = array<i64: 1, 68>}, {transform_indices = @transform_5, window_bounds = array<i64: 8, 4>}]} {
    %c0 = arith.constant 0 : index
    %c0_0 = arith.constant 0 : index
    %0 = vector.load %arg5[%c0, %c0_0] : memref<1x68xf32, #tpu.memory_space<vmem>>, vector<1x68xf32>
    %1 = vector.extract_strided_slice %0 {offsets = [0, 0], sizes = [1, 32], strides = [1, 1]} : vector<1x68xf32> to vector<1x32xf32>
    %2 = vector.extract_strided_slice %0 {offsets = [0, 32], sizes = [1, 32], strides = [1, 1]} : vector<1x68xf32> to vector<1x32xf32>
    %3 = vector.extract_strided_slice %0 {offsets = [0, 64], sizes = [1, 4], strides = [1, 1]} : vector<1x68xf32> to vector<1x4xf32>
    %c0_1 = arith.constant 0 : index
    %c0_2 = arith.constant 0 : index
    %4 = vector.load %arg1[%c0_1, %c0_2] : memref<8x8xbf16, #tpu.memory_space<vmem>>, vector<8x8xbf16>
    %c0_3 = arith.constant 0 : index
    %c0_4 = arith.constant 0 : index
    %5 = vector.load %arg2[%c0_3, %c0_4] : memref<8x32xbf16, #tpu.memory_space<vmem>>, vector<8x32xbf16>
    %cst = arith.constant dense<0.000000e+00> : vector<8x32xf32>
    %6 = tpu.matmul %4, %5, %cst {dimension_numbers = #tpu.dot_dimension_numbers<[1], [0], [0], [1], [0, 0, 1, 1], [], []>} : vector<8x8xbf16>, vector<8x32xbf16>, vector<8x32xf32> -> vector<8x32xf32>
    %7 = vector.broadcast %1 : vector<1x32xf32> to vector<8x32xf32>
    %8 = arith.addf %6, %7 : vector<8x32xf32>
    %cst_5 = arith.constant 0.000000e+00 : f32
    %9 = vector.broadcast %cst_5 : f32 to vector<8x32xf32>
    %10 = arith.maximumf %8, %9 : vector<8x32xf32>
    %11 = arith.truncf %10 : vector<8x32xf32> to vector<8x32xbf16>
    %c0_6 = arith.constant 0 : index
    %c0_7 = arith.constant 0 : index
    %12 = vector.load %arg3[%c0_6, %c0_7] : memref<32x32xbf16, #tpu.memory_space<vmem>>, vector<32x32xbf16>
    %cst_8 = arith.constant dense<0.000000e+00> : vector<8x32xf32>
    %13 = tpu.matmul %11, %12, %cst_8 {dimension_numbers = #tpu.dot_dimension_numbers<[1], [0], [0], [1], [0, 0, 1, 1], [], []>} : vector<8x32xbf16>, vector<32x32xbf16>, vector<8x32xf32> -> vector<8x32xf32>
    %14 = vector.broadcast %2 : vector<1x32xf32> to vector<8x32xf32>
    %15 = arith.addf %13, %14 : vector<8x32xf32>
    %cst_9 = arith.constant 0.000000e+00 : f32
    %16 = vector.broadcast %cst_9 : f32 to vector<8x32xf32>
    %17 = arith.maximumf %15, %16 : vector<8x32xf32>
    %18 = arith.truncf %17 : vector<8x32xf32> to vector<8x32xbf16>
    %c0_10 = arith.constant 0 : index
    %c0_11 = arith.constant 0 : index
    %19 = vector.load %arg4[%c0_10, %c0_11] : memref<32x4xbf16, #tpu.memory_space<vmem>>, vector<32x4xbf16>
    %cst_12 = arith.constant dense<0.000000e+00> : vector<8x4xf32>
    %20 = tpu.matmul %18, %19, %cst_12 {dimension_numbers = #tpu.dot_dimension_numbers<[1], [0], [0], [1], [0, 0, 1, 1], [], []>} : vector<8x32xbf16>, vector<32x4xbf16>, vector<8x4xf32> -> vector<8x4xf32>
    %21 = vector.broadcast %3 : vector<1x4xf32> to vector<8x4xf32>
    %22 = arith.addf %20, %21 : vector<8x4xf32>
    %23 = math.tanh %22 : vector<8x4xf32>
    %c0_13 = arith.constant 0 : index
    %c0_14 = arith.constant 0 : index
    %24 = vector.load %arg6[%c0_13, %c0_14] : memref<8x4xf32, #tpu.memory_space<vmem>>, vector<8x4xf32>
    tpu.vector_store %arg6[%c0_13, %c0_14], %23 {strides = array<i32>} : memref<8x4xf32, #tpu.memory_space<vmem>>, vector<8x4xf32>,
    return
  }
  func.func @transform_0(%arg0: i32) -> (i32, i32) {
    %c0_i32 = arith.constant 0 : i32
    %c0_i32_0 = arith.constant 0 : i32
    return %arg0, %c0_i32 : i32, i32
  }
  func.func @transform_1(%arg0: i32) -> (i32, i32) {
    %c0_i32 = arith.constant 0 : i32
    %c0_i32_0 = arith.constant 0 : i32
    %c0_i32_1 = arith.constant 0 : i32
    return %c0_i32, %c0_i32_0 : i32, i32
  }
  func.func @transform_2(%arg0: i32) -> (i32, i32) {
    %c0_i32 = arith.constant 0 : i32
    %c0_i32_0 = arith.constant 0 : i32
    %c0_i32_1 = arith.constant 0 : i32
    return %c0_i32, %c0_i32_0 : i32, i32
  }
  func.func @transform_3(%arg0: i32) -> (i32, i32) {
    %c0_i32 = arith.constant 0 : i32
    %c0_i32_0 = arith.constant 0 : i32
    %c0_i32_1 = arith.constant 0 : i32
    return %c0_i32, %c0_i32_0 : i32, i32
  }
  func.func @transform_4(%arg0: i32) -> (i32, i32) {
    %c0_i32 = arith.constant 0 : i32
    %c0_i32_0 = arith.constant 0 : i32
    %c0_i32_1 = arith.constant 0 : i32
    return %c0_i32, %c0_i32_0 : i32, i32
  }
  func.func @transform_5(%arg0: i32) -> (i32, i32) {
    %c0_i32 = arith.constant 0 : i32
    %c0_i32_0 = arith.constant 0 : i32
    return %arg0, %c0_i32 : i32, i32
  }
}

</mosaic_0001>

<llo_original>
// kernel: tpu_custom_call.1
$region0: #{tpu_custom_call.1}
  #allocation0 [shape = 'u32[]', space=smem, size = 0x4, offset = 0x4, fixed_abs, tag = 'smem constant byte address 0x4 - core index']
  #allocation1 [shape = 'u32[144,128]{1,0:T(1,128)}', space=vmem, size = 0x12000, scoped, tag = 'internal scratch']
  %s0 = inlined_call_operand.vmem [shape: bf16[8,8], index: 0, kind: input, shape index: {}]
  %s1 = inlined_call_operand.vmem [shape: bf16[8,32], index: 1, kind: input, shape index: {}]
  %s2 = inlined_call_operand.vmem [shape: bf16[32,32], index: 2, kind: input, shape index: {}]
  %s3 = inlined_call_operand.vmem [shape: bf16[32,4], index: 3, kind: input, shape index: {}]
  %s4 = inlined_call_operand.vmem [shape: f32[1,68], index: 4, kind: input, shape index: {}]
  %s5 = inlined_call_operand.vmem [shape: f32[8,4], index: 5, kind: output, shape index: {}]
  %s6 = sld [smem:[#allocation0]]
  $region30: #{tpu_custom_call.1} parent=0
    _
  %s8 = ssub.s32 1, %s6
  %s9 = scalar_select 0, %s8, %s6
  // Predicated region
  $region2: #{tpu_custom_call.1} parent=0 // pred_check
    _
  $region3: #{tpu_custom_call.1} parent=0 // pred_check_branch
    %11 = sbr.rel (0) target = $region5
  $region4: #{tpu_custom_call.1} parent=0 // pred_region
    _
  $region5: #{tpu_custom_call.1} parent=0 // pred_fallthru
    _
  // Predicated region
  $region6: #{tpu_custom_call.1} parent=0 // pred_check
    _
  $region7: #{tpu_custom_call.1} parent=0 // pred_check_branch
    %13 = sbr.rel (0) target = $region9
  $region8: #{tpu_custom_call.1} parent=0 // pred_region
    _
  $region9: #{tpu_custom_call.1} parent=0 // pred_fallthru
    _
  // Predicated region
  $region10: #{tpu_custom_call.1} parent=0 // pred_check
    _
  $region11: #{tpu_custom_call.1} parent=0 // pred_check_branch
    %15 = sbr.rel (0) target = $region13
  $region12: #{tpu_custom_call.1} parent=0 // pred_region
    _
  $region13: #{tpu_custom_call.1} parent=0 // pred_fallthru
    _
  // Predicated region
  $region14: #{tpu_custom_call.1} parent=0 // pred_check
    _
  $region15: #{tpu_custom_call.1} parent=0 // pred_check_branch
    %17 = sbr.rel (0) target = $region17
  $region16: #{tpu_custom_call.1} parent=0 // pred_region
    _
  $region17: #{tpu_custom_call.1} parent=0 // pred_fallthru
    _
  // Predicated region
  $region18: #{tpu_custom_call.1} parent=0 // pred_check
    _
  $region19: #{tpu_custom_call.1} parent=0 // pred_check_branch
    %19 = sbr.rel (0) target = $region21
  $region20: #{tpu_custom_call.1} parent=0 // pred_region
    _
  $region21: #{tpu_custom_call.1} parent=0 // pred_fallthru
    _
  %v21 = vld [vmem:[%s4] sm:$0x1]
  %v22 = vld [vmem:[%s0] sm:$0xf]
  %v23 = vld [vmem:[%s1] sm:$0xf]
  %v25 = vlaneseq
  %v26 = vshrl.u32 %v25, 7
  %v27 = vsub.s32 0, %v26
  %v28 = vrot.slane %v21, %v27
  %vm30 = vcmask 64512
  %v32 = vsel %vm30, %v22, 0
  %vm34 = vcmask 1043456
  %v36 = vsel %vm34, %v23, 0
  %38 = vmatprep.subr.bf16.mxu0 0
  %39 = vmatpush1.bf16.msra.mxu0 %v36
  %40 = vmatprep.subr.bf16.mxu0 0
  %41 = vmatpush1.bf16.msra.mxu0 0
  %42 = vmatprep.subr.bf16.mxu0 0
  %43 = vmatpush1.bf16.msra.mxu0 0
  %44 = vmatprep.subr.bf16.mxu0 0
  %45 = vmatpush1.bf16.msra.mxu0 0
  %46 = vmatprep.subr.bf16.mxu0 0
  %47 = vmatpush1.bf16.msra.mxu0 0
  %48 = vmatprep.subr.bf16.mxu0 0
  %49 = vmatpush1.bf16.msra.mxu0 0
  %50 = vmatprep.subr.bf16.mxu0 0
  %51 = vmatpush1.bf16.msra.mxu0 0
  %52 = vmatprep.subr.bf16.mxu0 0
  %53 = vmatpush1.bf16.msra.mxu0 0
  %54 = vmatprep.subr.bf16.mxu0 0
  %55 = vmatpush1.bf16.msra.mxu0 0
  %56 = vmatprep.subr.bf16.mxu0 0
  %57 = vmatpush1.bf16.msra.mxu0 0
  %58 = vmatprep.subr.bf16.mxu0 0
  %59 = vmatpush1.bf16.msra.mxu0 0
  %60 = vmatprep.subr.bf16.mxu0 0
  %61 = vmatpush1.bf16.msra.mxu0 0
  %62 = vmatprep.subr.bf16.mxu0 0
  %63 = vmatpush1.bf16.msra.mxu0 0
  %64 = vmatprep.subr.bf16.mxu0 0
  %65 = vmatpush1.bf16.msra.mxu0 0
  %66 = vmatprep.subr.bf16.mxu0 0
  %67 = vmatpush1.bf16.msra.mxu0 0
  %68 = vmatprep.subr.bf16.mxu0 0
  %69 = vmatpush1.bf16.msra.mxu0 0
  %70 = vmatprep.mubr.bf16.mxu0 0
  %71 = vmatmul.mubr.bf16.gmra.mrb[0].mxu0 %v32
  %v72 = vpop.f32.mrb[0].mxu0
  %v73 = vadd.f32 %v28, %v72
  %v74 = vpop.f32.mrb[0].mxu0
  %v75 = vpop.f32.mrb[0].mxu0
  %v76 = vpop.f32.mrb[0].mxu0
  %77 = vdwg.mxu0
  %v78 = vmax.f32 %v73, 0.0
  %v79 = vpack.c.bf16 %v78, %v78
  %v80 = vld [vmem:[%s2] sm:$0xf]
  %v81 = vld [vmem:[%s2 + $0x4] sm:$0xf]
  %v82 = vld [vmem:[%s2 + $0x8] sm:$0xf]
  %v83 = vld [vmem:[%s2 + $0xc] sm:$0xf]
  %v88 = vunpack.c.l.b16 %v80
  %v89 = vunpack.c.l.b16 %v81
  %v90 = vunpack.c.l.b16 %v82
  %v91 = vunpack.c.l.b16 %v83
  %v92 = vpack.c.b16 %v89, %v88
  %v93 = vpack.c.b16 %v91, %v90
  %96 = vrot.lane.b32.xlu0 %v28, 96
  %v97 = vpop.permute.xlu0 %96
  %vm99 = vcmask 261120
  %v101 = vsel %vm99, %v79, 0
  %103 = vmatprep.subr.bf16.mxu0 0
  %104 = vmatpush1.bf16.msra.mxu0 %v92
  %105 = vmatprep.subr.bf16.mxu0 0
  %106 = vmatpush1.bf16.msra.mxu0 %v93
  %107 = vmatprep.subr.bf16.mxu0 0
  %108 = vmatpush1.bf16.msra.mxu0 0
  %109 = vmatprep.subr.bf16.mxu0 0
  %110 = vmatpush1.bf16.msra.mxu0 0
  %111 = vmatprep.subr.bf16.mxu0 0
  %112 = vmatpush1.bf16.msra.mxu0 0
  %113 = vmatprep.subr.bf16.mxu0 0
  %114 = vmatpush1.bf16.msra.mxu0 0
  %115 = vmatprep.subr.bf16.mxu0 0
  %116 = vmatpush1.bf16.msra.mxu0 0
  %117 = vmatprep.subr.bf16.mxu0 0
  %118 = vmatpush1.bf16.msra.mxu0 0
  %119 = vmatprep.subr.bf16.mxu0 0
  %120 = vmatpush1.bf16.msra.mxu0 0
  %121 = vmatprep.subr.bf16.mxu0 0
  %122 = vmatpush1.bf16.msra.mxu0 0
  %123 = vmatprep.subr.bf16.mxu0 0
  %124 = vmatpush1.bf16.msra.mxu0 0
  %125 = vmatprep.subr.bf16.mxu0 0
  %126 = vmatpush1.bf16.msra.mxu0 0
  %127 = vmatprep.subr.bf16.mxu0 0
  %128 = vmatpush1.bf16.msra.mxu0 0
  %129 = vmatprep.subr.bf16.mxu0 0
  %130 = vmatpush1.bf16.msra.mxu0 0
  %131 = vmatprep.subr.bf16.mxu0 0
  %132 = vmatpush1.bf16.msra.mxu0 0
  %133 = vmatprep.subr.bf16.mxu0 0
  %134 = vmatpush1.bf16.msra.mxu0 0
  %135 = vmatprep.mubr.bf16.mxu0 0
  %136 = vmatmul.mubr.bf16.gmra.mrb[0].mxu0 %v101
  %v137 = vpop.f32.mrb[0].mxu0
  %v138 = vadd.f32 %v97, %v137
  %v139 = vpop.f32.mrb[0].mxu0
  %v140 = vpop.f32.mrb[0].mxu0
  %v141 = vpop.f32.mrb[0].mxu0
  %142 = vdwg.mxu0
  %v143 = vmax.f32 %v138, 0.0
  %v144 = vpack.c.bf16 %v143, %v143
  %v145 = vld [vmem:[%s3] sm:$0xf]
  %v146 = vld [vmem:[%s3 + $0x4] sm:$0xf]
  %v147 = vld [vmem:[%s3 + $0x8] sm:$0xf]
  %v148 = vld [vmem:[%s3 + $0xc] sm:$0xf]
  %v153 = vunpack.c.l.b16 %v145
  %v154 = vunpack.c.l.b16 %v146
  %v155 = vunpack.c.l.b16 %v147
  %v156 = vunpack.c.l.b16 %v148
  %v157 = vpack.c.b16 %v154, %v153
  %v158 = vpack.c.b16 %v156, %v155
  %161 = vrot.lane.b32.xlu0 %v28, 64
  %v162 = vpop.permute.xlu0 %161
  %v165 = vsel %vm99, %v144, 0
  %167 = vmatprep.subr.bf16.mxu0 0
  %168 = vmatpush1.bf16.msra.mxu0 %v157
  %169 = vmatprep.subr.bf16.mxu0 0
  %170 = vmatpush1.bf16.msra.mxu0 %v158
  %171 = vmatprep.subr.bf16.mxu0 0
  %172 = vmatpush1.bf16.msra.mxu0 0
  %173 = vmatprep.subr.bf16.mxu0 0
  %174 = vmatpush1.bf16.msra.mxu0 0
  %175 = vmatprep.subr.bf16.mxu0 0
  %176 = vmatpush1.bf16.msra.mxu0 0
  %177 = vmatprep.subr.bf16.mxu0 0
  %178 = vmatpush1.bf16.msra.mxu0 0
  %179 = vmatprep.subr.bf16.mxu0 0
  %180 = vmatpush1.bf16.msra.mxu0 0
  %181 = vmatprep.subr.bf16.mxu0 0
  %182 = vmatpush1.bf16.msra.mxu0 0
  %183 = vmatprep.subr.bf16.mxu0 0
  %184 = vmatpush1.bf16.msra.mxu0 0
  %185 = vmatprep.subr.bf16.mxu0 0
  %186 = vmatpush1.bf16.msra.mxu0 0
  %187 = vmatprep.subr.bf16.mxu0 0
  %188 = vmatpush1.bf16.msra.mxu0 0
  %189 = vmatprep.subr.bf16.mxu0 0
  %190 = vmatpush1.bf16.msra.mxu0 0
  %191 = vmatprep.subr.bf16.mxu0 0
  %192 = vmatpush1.bf16.msra.mxu0 0
  %193 = vmatprep.subr.bf16.mxu0 0
  %194 = vmatpush1.bf16.msra.mxu0 0
  %195 = vmatprep.subr.bf16.mxu0 0
  %196 = vmatpush1.bf16.msra.mxu0 0
  %197 = vmatprep.subr.bf16.mxu0 0
  %198 = vmatpush1.bf16.msra.mxu0 0
  %199 = vmatprep.mubr.bf16.mxu0 0
  %200 = vmatmul.mubr.bf16.gmra.mrb[0].mxu0 %v165
  %v201 = vpop.f32.mrb[0].mxu0
  %v202 = vadd.f32 %v162, %v201
  %v203 = vpop.f32.mrb[0].mxu0
  %v204 = vpop.f32.mrb[0].mxu0
  %v205 = vpop.f32.mrb[0].mxu0
  %206 = vdwg.mxu0
  %v207 = vtanh.pop %v202
  %vm208 = vcmask 31744
  %209 = vst.msk [vmem:[%s5] sm:$0xff] %vm208, %v207
  // Predicated region
  $region22: #{tpu_custom_call.1} parent=0 // pred_check
    _
  $region23: #{tpu_custom_call.1} parent=0 // pred_check_branch
    %211 = sbr.rel (0) target = $region25
  $region24: #{tpu_custom_call.1} parent=0 // pred_region
    _
  $region25: #{tpu_custom_call.1} parent=0 // pred_fallthru
    _
  // Predicated region
  $region26: #{tpu_custom_call.1} parent=0 // pred_check
    _
  $region27: #{tpu_custom_call.1} parent=0 // pred_check_branch
    %213 = sbr.rel (0) target = $region29
  $region28: #{tpu_custom_call.1} parent=0 // pred_region
    _
  $region29: #{tpu_custom_call.1} parent=0 // pred_fallthru
    _

</llo_original>
